<compile_context>
chip_gen: v7x
topology: tpu7x:2x2x1
jax: 0.10.0
libtpu: 0.0.40
codegen_flags: <defaults>
</compile_context>

<pallas_src>
import jax
import jax.numpy as jnp
from jax.experimental import pallas as pl
from jax.experimental.pallas import tpu as pltpu

HIDDEN1 = 80          # hidden width of layer 1 in the PyTorch module
HIDDEN2 = 128         # hidden width of layer 2
H1_PAD = 128          # hidden1 zero-padded to a full 128-lane tile


def _round_up(n, m):
    return (n + m - 1) // m * m


def mlp_kernel(x_ref, w1_ref, b1_ref, w2_ref, b2_ref, w3_ref, b3_ref, o_ref):
    # In-kernel bf16 cast of the activation tile (avoids a wrapper-side HBM pass).
    x = x_ref[...].astype(w1_ref.dtype)
    # Layer 1: (TB, d_in) @ (d_in, 128)  [bf16 MXU, f32 accumulate] + bias + ReLU (f32 VPU)
    h1 = jnp.dot(x, w1_ref[...], preferred_element_type=jnp.float32)
    h1 = jnp.maximum(h1 + b1_ref[...], 0.0)
    # Layer 2: (TB, 128) @ (128, 128)
    h2 = jnp.dot(h1.astype(w2_ref.dtype), w2_ref[...],
                 preferred_element_type=jnp.float32)
    h2 = jnp.maximum(h2 + b2_ref[...], 0.0)
    # Layer 3: (TB, 128) @ (128, d_out) -> direct f32 store of the un-padded output
    h3 = jnp.dot(h2.astype(w3_ref.dtype), w3_ref[...],
                 preferred_element_type=jnp.float32)
    o_ref[...] = jnp.maximum(h3 + b3_ref[...], 0.0).astype(o_ref.dtype)


def prepare_params(params, compute_dtype=jnp.bfloat16):
    """One-time weight prep (call ONCE, outside the inference loop).

    Zero-pads hidden 80->128 (W1 cols, b1, W2 rows) so layer-1 N and layer-2 K
    are full 128-lane MXU tiles, and casts matmul weights to `compute_dtype`.
    Biases stay f32 (the epilogue runs in f32). The padding is mathematically
    inert: padded h1 lanes are ReLU(0 + 0) = 0 and multiply into zero W2 rows.
    """
    w1, b1, w2, b2, w3, b3 = params
    d_in = w1.shape[0]
    w1p = jnp.zeros((d_in, H1_PAD), jnp.float32).at[:, :HIDDEN1].set(w1)
    b1p = jnp.zeros((1, H1_PAD), jnp.float32).at[:, :HIDDEN1].set(b1)
    w2p = jnp.zeros((H1_PAD, HIDDEN2), jnp.float32).at[:HIDDEN1, :].set(w2)
    return (w1p.astype(compute_dtype), b1p,
            w2p.astype(compute_dtype), b2.astype(jnp.float32),
            w3.astype(compute_dtype), b3.astype(jnp.float32))


def _pick_batch_tile(batch, max_tile):
    """Largest multiple-of-8 tile <= max_tile that keeps >= 2 grid steps.

    >=2 steps lets v7x shard the parallel batch axis across both TensorCores
    and keeps the input-load / output-store pipeline busy; a large tile
    amortizes the fixed per-step overhead on all generations.
    """
    if batch <= 8:
        return 8
    half = _round_up(pl.cdiv(batch, 2), 8)
    return max(8, min(max_tile, half))


def net_forward(x, prepared_params, *, max_batch_tile=1024):
    """Fused MLP forward. x: (B, input_size) f32. Returns (B, output_size) f32.

    `prepared_params` must come from `prepare_params` (hoisted weight prep).
    """
    w1p, b1p, w2p, b2p, w3p, b3p = prepared_params
    B, d_in = x.shape
    d_out = w3p.shape[1]

    batch_tile = _pick_batch_tile(B, max_batch_tile)
    grid = (pl.cdiv(B, batch_tile),)

    # Weights/biases: full-array blocks with a constant index_map -> fetched
    # once, VMEM-resident for the whole grid. (Single-buffering them would
    # save ~50 KB of VMEM but double-buffered copies are already negligible.)
    def full(arr):
        nd = arr.ndim
        return pl.BlockSpec(arr.shape, lambda *_: (0,) * nd)

    flops = 2 * B * (d_in * H1_PAD + H1_PAD * HIDDEN2 + HIDDEN2 * d_out)
    bytes_accessed = (
        x.size * x.dtype.itemsize
        + sum(a.size * a.dtype.itemsize for a in prepared_params)
        + B * d_out * 4
    )

    return pl.pallas_call(
        mlp_kernel,
        out_shape=jax.ShapeDtypeStruct((B, d_out), jnp.float32),
        grid_spec=pltpu.PrefetchScalarGridSpec(
            num_scalar_prefetch=0,
            grid=grid,
            in_specs=[
                pl.BlockSpec((batch_tile, d_in), lambda i: (i, 0)),   # x tile
                full(w1p), full(b1p),
                full(w2p), full(b2p),
                full(w3p), full(b3p),
            ],
            # Output block spans the full (un-padded) output width -> the
            # writeback DMA is contiguous in HBM and there is no trailing
            # slice/copy pass.
            out_specs=pl.BlockSpec((batch_tile, d_out), lambda i: (i, 0)),
        ),
        compiler_params=pltpu.CompilerParams(
            dimension_semantics=("parallel",),
        ),
        cost_estimate=pl.CostEstimate(
            flops=flops, transcendentals=0, bytes_accessed=bytes_accessed),
    )(x, w1p, b1p, w2p, b2p, w3p, b3p)


def init_params(key, input_size, output_size):
    """Deterministic init mirroring PyTorch nn.Linear shapes/bounds (W stored (in,out))."""
    ks = jax.random.split(key, 6)

    def lin(kw, kb, fan_in, fan_out):
        bound = 1.0 / jnp.sqrt(fan_in)
        w = jax.random.uniform(kw, (fan_in, fan_out), jnp.float32, -bound, bound)
        b = jax.random.uniform(kb, (1, fan_out), jnp.float32, -bound, bound)
        return w, b

    w1, b1 = lin(ks[0], ks[1], input_size, HIDDEN1)
    w2, b2 = lin(ks[2], ks[3], HIDDEN1, HIDDEN2)
    w3, b3 = lin(ks[4], ks[5], HIDDEN2, output_size)
    return (w1, b1, w2, b2, w3, b3)


def net_forward_ref(x, params, compute_dtype=jnp.bfloat16):
    """Pure-JAX reference mirroring the kernel's bf16-matmul / f32-epilogue math."""
    w1, b1, w2, b2, w3, b3 = params
    cd = compute_dtype
    h = jnp.dot(x.astype(cd), w1.astype(cd), preferred_element_type=jnp.float32)
    h = jnp.maximum(h + b1, 0.0)
    h = jnp.dot(h.astype(cd), w2.astype(cd), preferred_element_type=jnp.float32)
    h = jnp.maximum(h + b2, 0.0)
    h = jnp.dot(h.astype(cd), w3.astype(cd), preferred_element_type=jnp.float32)
    return jnp.maximum(h + b3, 0.0)


if __name__ == "__main__":
    key = jax.random.PRNGKey(0)
    k_x, k_p = jax.random.split(key)

    # Batch not a multiple of the tile (exercises the masked partial last
    # block) and large enough for a 2-step grid (pipelining + v7x megacore).
    batch, input_size, output_size = 200, 32, 16
    x = jax.random.normal(k_x, (batch, input_size), jnp.float32)
    params = init_params(k_p, input_size, output_size)

    # Weight prep is hoisted out of the call path: done once, reused per call.
    prepared = prepare_params(params)

    fwd = jax.jit(net_forward)
    y = jax.block_until_ready(fwd(x, prepared))

    y_ref = net_forward_ref(x, params)
    assert y.shape == (batch, output_size)
    assert jnp.allclose(y, y_ref, atol=5e-3, rtol=5e-3), (
        float(jnp.max(jnp.abs(y - y_ref))))

    print("KERNEL_OK")
</pallas_src>

<mosaic_0001>
module attributes {stable_mosaic.version = 11 : i64} {
  func.func @mlp_kernel(%arg0: i32, %arg1: memref<104x32xf32, #tpu.memory_space<vmem>>, %arg2: memref<32x128xbf16, #tpu.memory_space<vmem>>, %arg3: memref<1x128xf32, #tpu.memory_space<vmem>>, %arg4: memref<128x128xbf16, #tpu.memory_space<vmem>>, %arg5: memref<1x128xf32, #tpu.memory_space<vmem>>, %arg6: memref<128x16xbf16, #tpu.memory_space<vmem>>, %arg7: memref<1x16xf32, #tpu.memory_space<vmem>>, %arg8: memref<104x16xf32, #tpu.memory_space<vmem>>) attributes {dimension_semantics = [#tpu.dimension_semantics<parallel>], iteration_bounds = array<i64: 2>, scalar_prefetch = 0 : i64, scratch_operands = 0 : i64, tpu.core_type = #tpu.core_type<tc>, window_params = [{transform_indices = @transform_0, window_bounds = array<i64: 104, 32>}, {pipeline_mode = #tpu.pipeline_mode<synchronous>, transform_indices = @transform_1, window_bounds = array<i64: 32, 128>}, {pipeline_mode = #tpu.pipeline_mode<synchronous>, transform_indices = @transform_2, window_bounds = array<i64: 1, 128>}, {pipeline_mode = #tpu.pipeline_mode<synchronous>, transform_indices = @transform_3, window_bounds = array<i64: 128, 128>}, {pipeline_mode = #tpu.pipeline_mode<synchronous>, transform_indices = @transform_4, window_bounds = array<i64: 1, 128>}, {pipeline_mode = #tpu.pipeline_mode<synchronous>, transform_indices = @transform_5, window_bounds = array<i64: 128, 16>}, {pipeline_mode = #tpu.pipeline_mode<synchronous>, transform_indices = @transform_6, window_bounds = array<i64: 1, 16>}, {transform_indices = @transform_7, window_bounds = array<i64: 104, 16>}]} {
    %c0 = arith.constant 0 : index
    %c0_0 = arith.constant 0 : index
    %0 = vector.load %arg1[%c0, %c0_0] : memref<104x32xf32, #tpu.memory_space<vmem>>, vector<104x32xf32>
    %1 = arith.truncf %0 : vector<104x32xf32> to vector<104x32xbf16>
    %c0_1 = arith.constant 0 : index
    %c0_2 = arith.constant 0 : index
    %2 = vector.load %arg2[%c0_1, %c0_2] : memref<32x128xbf16, #tpu.memory_space<vmem>>, vector<32x128xbf16>
    %cst = arith.constant dense<0.000000e+00> : vector<104x128xf32>
    %3 = tpu.matmul %1, %2, %cst {dimension_numbers = #tpu.dot_dimension_numbers<[1], [0], [0], [1], [0, 0, 1, 1], [], []>} : vector<104x32xbf16>, vector<32x128xbf16>, vector<104x128xf32> -> vector<104x128xf32>
    %c0_3 = arith.constant 0 : index
    %c0_4 = arith.constant 0 : index
    %4 = vector.load %arg3[%c0_3, %c0_4] : memref<1x128xf32, #tpu.memory_space<vmem>>, vector<1x128xf32>
    %5 = vector.broadcast %4 : vector<1x128xf32> to vector<104x128xf32>
    %6 = arith.addf %3, %5 : vector<104x128xf32>
    %cst_5 = arith.constant 0.000000e+00 : f32
    %7 = vector.broadcast %cst_5 : f32 to vector<104x128xf32>
    %8 = arith.maximumf %6, %7 : vector<104x128xf32>
    %9 = arith.truncf %8 : vector<104x128xf32> to vector<104x128xbf16>
    %c0_6 = arith.constant 0 : index
    %c0_7 = arith.constant 0 : index
    %10 = vector.load %arg4[%c0_6, %c0_7] : memref<128x128xbf16, #tpu.memory_space<vmem>>, vector<128x128xbf16>
    %cst_8 = arith.constant dense<0.000000e+00> : vector<104x128xf32>
    %11 = tpu.matmul %9, %10, %cst_8 {dimension_numbers = #tpu.dot_dimension_numbers<[1], [0], [0], [1], [0, 0, 1, 1], [], []>} : vector<104x128xbf16>, vector<128x128xbf16>, vector<104x128xf32> -> vector<104x128xf32>
    %c0_9 = arith.constant 0 : index
    %c0_10 = arith.constant 0 : index
    %12 = vector.load %arg5[%c0_9, %c0_10] : memref<1x128xf32, #tpu.memory_space<vmem>>, vector<1x128xf32>
    %13 = vector.broadcast %12 : vector<1x128xf32> to vector<104x128xf32>
    %14 = arith.addf %11, %13 : vector<104x128xf32>
    %cst_11 = arith.constant 0.000000e+00 : f32
    %15 = vector.broadcast %cst_11 : f32 to vector<104x128xf32>
    %16 = arith.maximumf %14, %15 : vector<104x128xf32>
    %17 = arith.truncf %16 : vector<104x128xf32> to vector<104x128xbf16>
    %c0_12 = arith.constant 0 : index
    %c0_13 = arith.constant 0 : index
    %18 = vector.load %arg6[%c0_12, %c0_13] : memref<128x16xbf16, #tpu.memory_space<vmem>>, vector<128x16xbf16>
    %cst_14 = arith.constant dense<0.000000e+00> : vector<104x16xf32>
    %19 = tpu.matmul %17, %18, %cst_14 {dimension_numbers = #tpu.dot_dimension_numbers<[1], [0], [0], [1], [0, 0, 1, 1], [], []>} : vector<104x128xbf16>, vector<128x16xbf16>, vector<104x16xf32> -> vector<104x16xf32>
    %c0_15 = arith.constant 0 : index
    %c0_16 = arith.constant 0 : index
    %20 = vector.load %arg7[%c0_15, %c0_16] : memref<1x16xf32, #tpu.memory_space<vmem>>, vector<1x16xf32>
    %21 = vector.broadcast %20 : vector<1x16xf32> to vector<104x16xf32>
    %22 = arith.addf %19, %21 : vector<104x16xf32>
    %cst_17 = arith.constant 0.000000e+00 : f32
    %23 = vector.broadcast %cst_17 : f32 to vector<104x16xf32>
    %24 = arith.maximumf %22, %23 : vector<104x16xf32>
    %c0_18 = arith.constant 0 : index
    %c0_19 = arith.constant 0 : index
    %25 = vector.load %arg8[%c0_18, %c0_19] : memref<104x16xf32, #tpu.memory_space<vmem>>, vector<104x16xf32>
    tpu.vector_store %arg8[%c0_18, %c0_19], %24 {strides = array<i32>} : memref<104x16xf32, #tpu.memory_space<vmem>>, vector<104x16xf32>,
    return
  }
  func.func @transform_0(%arg0: i32) -> (i32, i32) {
    %c0_i32 = arith.constant 0 : i32
    %c0_i32_0 = arith.constant 0 : i32
    return %arg0, %c0_i32 : i32, i32
  }
  func.func @transform_1(%arg0: i32) -> (i32, i32) {
    %c0_i32 = arith.constant 0 : i32
    %c0_i32_0 = arith.constant 0 : i32
    %c0_i32_1 = arith.constant 0 : i32
    return %c0_i32, %c0_i32_0 : i32, i32
  }
  func.func @transform_2(%arg0: i32) -> (i32, i32) {
    %c0_i32 = arith.constant 0 : i32
    %c0_i32_0 = arith.constant 0 : i32
    %c0_i32_1 = arith.constant 0 : i32
    return %c0_i32, %c0_i32_0 : i32, i32
  }
  func.func @transform_3(%arg0: i32) -> (i32, i32) {
    %c0_i32 = arith.constant 0 : i32
    %c0_i32_0 = arith.constant 0 : i32
    %c0_i32_1 = arith.constant 0 : i32
    return %c0_i32, %c0_i32_0 : i32, i32
  }
  func.func @transform_4(%arg0: i32) -> (i32, i32) {
    %c0_i32 = arith.constant 0 : i32
    %c0_i32_0 = arith.constant 0 : i32
    %c0_i32_1 = arith.constant 0 : i32
    return %c0_i32, %c0_i32_0 : i32, i32
  }
  func.func @transform_5(%arg0: i32) -> (i32, i32) {
    %c0_i32 = arith.constant 0 : i32
    %c0_i32_0 = arith.constant 0 : i32
    %c0_i32_1 = arith.constant 0 : i32
    return %c0_i32, %c0_i32_0 : i32, i32
  }
  func.func @transform_6(%arg0: i32) -> (i32, i32) {
    %c0_i32 = arith.constant 0 : i32
    %c0_i32_0 = arith.constant 0 : i32
    %c0_i32_1 = arith.constant 0 : i32
    return %c0_i32, %c0_i32_0 : i32, i32
  }
  func.func @transform_7(%arg0: i32) -> (i32, i32) {
    %c0_i32 = arith.constant 0 : i32
    %c0_i32_0 = arith.constant 0 : i32
    return %arg0, %c0_i32 : i32, i32
  }
}

</mosaic_0001>

<llo_original>
// kernel: net_forward.1
$region0: #{net_forward.1}
  #allocation0 [shape = 'u32[]', space=smem, size = 0x4, offset = 0x4, fixed_abs, tag = 'smem constant byte address 0x4 - core index']
  #allocation1 [shape = 'u32[144,128]{1,0:T(1,128)}', space=vmem, size = 0x12000, scoped, tag = 'internal scratch']
  %s0 = inlined_call_operand.vmem [shape: f32[200,32], index: 0, kind: input, shape index: {}]
  %s1 = inlined_call_operand.vmem [shape: bf16[32,128], index: 1, kind: input, shape index: {}]
  %s2 = inlined_call_operand.vmem [shape: f32[1,128], index: 2, kind: input, shape index: {}]
  %s3 = inlined_call_operand.vmem [shape: bf16[128,128], index: 3, kind: input, shape index: {}]
  %s4 = inlined_call_operand.vmem [shape: f32[1,128], index: 4, kind: input, shape index: {}]
  %s5 = inlined_call_operand.vmem [shape: bf16[128,16], index: 5, kind: input, shape index: {}]
  %s6 = inlined_call_operand.vmem [shape: f32[1,16], index: 6, kind: input, shape index: {}]
  %s7 = inlined_call_operand.vmem [shape: f32[200,16], index: 7, kind: output, shape index: {}]
  %s8 = sld [smem:[#allocation0]]
  $region109: #{net_forward.1} parent=0
    _
  %s10 = ssub.s32 1, %s8
  %s11 = scalar_select 0, %s10, %s8
  $region1: #{net_forward.1} parent=0
    #allocation2 [shape = 'u8[106496]{0}', space=vmem, size = 0x1a000, scoped, tag = 'output window, operand 0']
    loop: start=0, step=1, limit=4
    $region2: #{net_forward.1} parent=1 // loop_pre_header
      _
    $region3: #{net_forward.1} parent=1 // loop_header
      %s13 = sphi 0, %s17
      %p14 = scmp.ge.s32.totalorder %s13, 4
      %s23 = sphi 0, %s25
      %s26 = sphi 0, %s23
      %s27 = sphi 0, %s26
      %s43 = sphi 0, %s27
      %s47 = sphi 0, %s47
      %s49 = sphi 0, %s47
      %s50 = sphi 0, %s49
      %s64 = sphi 0, %s50
      %s68 = sphi 0, %s68
      %s70 = sphi 0, %s68
      %s71 = sphi 0, %s70
      %s85 = sphi 0, %s71
      %s89 = sphi 0, %s89
      %s91 = sphi 0, %s89
      %s92 = sphi 0, %s91
      %s106 = sphi 0, %s92
      %s110 = sphi 0, %s110
      %s112 = sphi 0, %s110
      %s113 = sphi 0, %s112
      %s127 = sphi 0, %s113
      %s131 = sphi 0, %s131
      %s133 = sphi 0, %s131
      %s134 = sphi 0, %s133
      %s148 = sphi 0, %s134
      %s152 = sphi 0, %s152
      %s154 = sphi 0, %s152
      %s155 = sphi 0, %s154
      %s169 = sphi 0, %s155
      %s175 = sphi 0, %s177
      %s178 = sphi 0, %s175
      %s179 = sphi 0, %s178
      %s195 = sphi 0, %s179
    $region4: #{net_forward.1} parent=1 // loop_header_branch
      %16 = sbr.rel (%p14) target = $region8
    $region5: #{net_forward.1} parent=1 // loop_body
      %s18 = ssub.s32 %s13, 1
      %s19 = ssub.s32 %s13, 2
      %s20 = sadd.s32 %s13, 1
      %s21 = ssub.s32 %s13, %s20
      %p22 = scmp.eq.s32.totalorder %s21, 0
      %s24 = sadd.s32 %s23, 1
      %s25 = scalar_select %p22, %s23, %s24
      %p28 = pneg %p22
      %p29 = scmp.eq.s32.totalorder %s13, 1
      %p30 = por %p28, %p29
      %p31 = scmp.ne.s32.totalorder %s23, %s26
      %p32 = scmp.eq.s32.totalorder %s13, 0
      %p33 = por %p31, %p32
      %p34 = scmp.ne.s32.totalorder %s23, %s26
      %p35 = scmp.eq.s32.totalorder %s18, 1
      %p36 = por %p34, %p35
      %p37 = scmp.ne.s32.totalorder %s26, %s27
      %p38 = scmp.eq.s32.totalorder %s18, 0
      %p39 = por %p37, %p38
      %p40 = scmp.ne.s32.totalorder %s26, %s27
      %p41 = scmp.eq.s32.totalorder %s19, 1
      %p42 = por %p40, %p41
      %p44 = scmp.ne.s32.totalorder %s27, %s43
      %p45 = scmp.eq.s32.totalorder %s19, 0
      %p46 = por %p44, %p45
      %s48 = sadd.s32 %s47, 1
      %p51 = scmp.eq.s32.totalorder %s13, 1
      %p52 = scmp.ne.s32.totalorder %s47, %s49
      %p53 = scmp.eq.s32.totalorder %s13, 0
      %p54 = por %p52, %p53
      %p55 = scmp.ne.s32.totalorder %s47, %s49
      %p56 = scmp.eq.s32.totalorder %s18, 1
      %p57 = por %p55, %p56
      %p58 = scmp.ne.s32.totalorder %s49, %s50
      %p59 = scmp.eq.s32.totalorder %s18, 0
      %p60 = por %p58, %p59
      %p61 = scmp.ne.s32.totalorder %s49, %s50
      %p62 = scmp.eq.s32.totalorder %s19, 1
      %p63 = por %p61, %p62
      %p65 = scmp.ne.s32.totalorder %s50, %s64
      %p66 = scmp.eq.s32.totalorder %s19, 0
      %p67 = por %p65, %p66
      %s69 = sadd.s32 %s68, 1
      %p72 = scmp.eq.s32.totalorder %s13, 1
      %p73 = scmp.ne.s32.totalorder %s68, %s70
      %p74 = scmp.eq.s32.totalorder %s13, 0
      %p75 = por %p73, %p74
      %p76 = scmp.ne.s32.totalorder %s68, %s70
      %p77 = scmp.eq.s32.totalorder %s18, 1
      %p78 = por %p76, %p77
      %p79 = scmp.ne.s32.totalorder %s70, %s71
      %p80 = scmp.eq.s32.totalorder %s18, 0
      %p81 = por %p79, %p80
      %p82 = scmp.ne.s32.totalorder %s70, %s71
      %p83 = scmp.eq.s32.totalorder %s19, 1
      %p84 = por %p82, %p83
      %p86 = scmp.ne.s32.totalorder %s71, %s85
      %p87 = scmp.eq.s32.totalorder %s19, 0
      %p88 = por %p86, %p87
      %s90 = sadd.s32 %s89, 1
      %p93 = scmp.eq.s32.totalorder %s13, 1
      %p94 = scmp.ne.s32.totalorder %s89, %s91
      %p95 = scmp.eq.s32.totalorder %s13, 0
      %p96 = por %p94, %p95
      %p97 = scmp.ne.s32.totalorder %s89, %s91
      %p98 = scmp.eq.s32.totalorder %s18, 1
      %p99 = por %p97, %p98
      %p100 = scmp.ne.s32.totalorder %s91, %s92
      %p101 = scmp.eq.s32.totalorder %s18, 0
      %p102 = por %p100, %p101
      %p103 = scmp.ne.s32.totalorder %s91, %s92
      %p104 = scmp.eq.s32.totalorder %s19, 1
      %p105 = por %p103, %p104
      %p107 = scmp.ne.s32.totalorder %s92, %s106
      %p108 = scmp.eq.s32.totalorder %s19, 0
      %p109 = por %p107, %p108
      %s111 = sadd.s32 %s110, 1
      %p114 = scmp.eq.s32.totalorder %s13, 1
      %p115 = scmp.ne.s32.totalorder %s110, %s112
      %p116 = scmp.eq.s32.totalorder %s13, 0
      %p117 = por %p115, %p116
      %p118 = scmp.ne.s32.totalorder %s110, %s112
      %p119 = scmp.eq.s32.totalorder %s18, 1
      %p120 = por %p118, %p119
      %p121 = scmp.ne.s32.totalorder %s112, %s113
      %p122 = scmp.eq.s32.totalorder %s18, 0
      %p123 = por %p121, %p122
      %p124 = scmp.ne.s32.totalorder %s112, %s113
      %p125 = scmp.eq.s32.totalorder %s19, 1
      %p126 = por %p124, %p125
      %p128 = scmp.ne.s32.totalorder %s113, %s127
      %p129 = scmp.eq.s32.totalorder %s19, 0
      %p130 = por %p128, %p129
      %s132 = sadd.s32 %s131, 1
      %p135 = scmp.eq.s32.totalorder %s13, 1
      %p136 = scmp.ne.s32.totalorder %s131, %s133
      %p137 = scmp.eq.s32.totalorder %s13, 0
      %p138 = por %p136, %p137
      %p139 = scmp.ne.s32.totalorder %s131, %s133
      %p140 = scmp.eq.s32.totalorder %s18, 1
      %p141 = por %p139, %p140
      %p142 = scmp.ne.s32.totalorder %s133, %s134
      %p143 = scmp.eq.s32.totalorder %s18, 0
      %p144 = por %p142, %p143
      %p145 = scmp.ne.s32.totalorder %s133, %s134
      %p146 = scmp.eq.s32.totalorder %s19, 1
      %p147 = por %p145, %p146
      %p149 = scmp.ne.s32.totalorder %s134, %s148
      %p150 = scmp.eq.s32.totalorder %s19, 0
      %p151 = por %p149, %p150
      %s153 = sadd.s32 %s152, 1
      %p156 = scmp.eq.s32.totalorder %s13, 1
      %p157 = scmp.ne.s32.totalorder %s152, %s154
      %p158 = scmp.eq.s32.totalorder %s13, 0
      %p159 = por %p157, %p158
      %p160 = scmp.ne.s32.totalorder %s152, %s154
      %p161 = scmp.eq.s32.totalorder %s18, 1
      %p162 = por %p160, %p161
      %p163 = scmp.ne.s32.totalorder %s154, %s155
      %p164 = scmp.eq.s32.totalorder %s18, 0
      %p165 = por %p163, %p164
      %p166 = scmp.ne.s32.totalorder %s154, %s155
      %p167 = scmp.eq.s32.totalorder %s19, 1
      %p168 = por %p166, %p167
      %p170 = scmp.ne.s32.totalorder %s155, %s169
      %p171 = scmp.eq.s32.totalorder %s19, 0
      %p172 = por %p170, %p171
      %s173 = ssub.s32 %s13, %s20
      %p174 = scmp.eq.s32.totalorder %s173, 0
      %s176 = sadd.s32 %s175, 1
      %s177 = scalar_select %p174, %s175, %s176
      %p180 = pneg %p174
      %p181 = scmp.eq.s32.totalorder %s13, 1
      %p182 = por %p180, %p181
      %p183 = scmp.ne.s32.totalorder %s175, %s178
      %p184 = scmp.eq.s32.totalorder %s13, 0
      %p185 = por %p183, %p184
      %p186 = scmp.ne.s32.totalorder %s175, %s178
      %p187 = scmp.eq.s32.totalorder %s18, 1
      %p188 = por %p186, %p187
      %p189 = scmp.ne.s32.totalorder %s178, %s179
      %p190 = scmp.eq.s32.totalorder %s18, 0
      %p191 = por %p189, %p190
      %p192 = scmp.ne.s32.totalorder %s178, %s179
      %p193 = scmp.eq.s32.totalorder %s19, 1
      %p194 = por %p192, %p193
      %p196 = scmp.ne.s32.totalorder %s179, %s195
      %p197 = scmp.eq.s32.totalorder %s19, 0
      %p198 = por %p196, %p197
      %p199 = scmp.le.s32.totalorder 1, %s13
      %p200 = scmp.lt.s32.totalorder %s13, 3
      %p201 = pnand %p199, %p200
      %p202 = pneg %p201
      // Predicated region
      $region9: #{net_forward.1} parent=5 // pred_check
        _
      $region10: #{net_forward.1} parent=5 // pred_check_branch
        %204 = sbr.rel (%p201) target = $region12
      $region11: #{net_forward.1} parent=5 // pred_region
        %s205 = ssub.s32 %s13, 1
        // Predicated region
        $region13: #{net_forward.1} parent=11 // pred_check
          %p206 = pneg %p60
        $region14: #{net_forward.1} parent=11 // pred_check_branch
          %208 = sbr.rel (%p206) target = $region16
        $region15: #{net_forward.1} parent=11 // pred_region
          _
        $region16: #{net_forward.1} parent=11 // pred_fallthru
          _
        // Predicated region
        $region17: #{net_forward.1} parent=11 // pred_check
          %p209 = pneg %p81
        $region18: #{net_forward.1} parent=11 // pred_check_branch
          %211 = sbr.rel (%p209) target = $region20
        $region19: #{net_forward.1} parent=11 // pred_region
          _
        $region20: #{net_forward.1} parent=11 // pred_fallthru
          _
        // Predicated region
        $region21: #{net_forward.1} parent=11 // pred_check
          %p212 = pneg %p102
        $region22: #{net_forward.1} parent=11 // pred_check_branch
          %214 = sbr.rel (%p212) target = $region24
        $region23: #{net_forward.1} parent=11 // pred_region
          _
        $region24: #{net_forward.1} parent=11 // pred_fallthru
          _
        // Predicated region
        $region25: #{net_forward.1} parent=11 // pred_check
          %p215 = pneg %p123
        $region26: #{net_forward.1} parent=11 // pred_check_branch
          %217 = sbr.rel (%p215) target = $region28
        $region27: #{net_forward.1} parent=11 // pred_region
          _
        $region28: #{net_forward.1} parent=11 // pred_fallthru
          _
        // Predicated region
        $region29: #{net_forward.1} parent=11 // pred_check
          %p218 = pneg %p144
        $region30: #{net_forward.1} parent=11 // pred_check_branch
          %220 = sbr.rel (%p218) target = $region32
        $region31: #{net_forward.1} parent=11 // pred_region
          _
        $region32: #{net_forward.1} parent=11 // pred_fallthru
          _
        // Predicated region
        $region33: #{net_forward.1} parent=11 // pred_check
          %p221 = pneg %p165
        $region34: #{net_forward.1} parent=11 // pred_check_branch
          %223 = sbr.rel (%p221) target = $region36
        $region35: #{net_forward.1} parent=11 // pred_region
          _
        $region36: #{net_forward.1} parent=11 // pred_fallthru
          _
      $region12: #{net_forward.1} parent=5 // pred_fallthru
        _
      %p224 = scmp.lt.s32.totalorder %s13, 2
      // Predicated region
      $region37: #{net_forward.1} parent=5 // pred_check
        %p225 = pneg %p224
      $region38: #{net_forward.1} parent=5 // pred_check_branch
        %227 = sbr.rel (%p225) target = $region40
      $region39: #{net_forward.1} parent=5 // pred_region
        // Predicated region
        $region41: #{net_forward.1} parent=39 // pred_check
          %p228 = pneg %p33
        $region42: #{net_forward.1} parent=39 // pred_check_branch
          %230 = sbr.rel (%p228) target = $region44
        $region43: #{net_forward.1} parent=39 // pred_region
          %s231 = smul.u32 13, %s13
          %s232 = ssub.s32 25, %s231
          %p233 = scmp.lt.s32.totalorder %s232, 13
          %s234 = scalar_select %p233, %s232, 13
          %s235 = smul.u32 128, %s234
          %p236 = scmp.lt.s32.totalorder %s231, 24
          %s237 = scalar_select %p236, %s231, 24
          %s238 = smul.addr %s237, 8
          %s239 = scalar_lea.vmem %s0, %s238
          %s240 = smul.u32 13, %s13
          %s241 = ssub.s32 25, %s240
          %p242 = scmp.lt.s32.totalorder %s241, 13
          %s243 = scalar_select %p242, %s241, 13
          %s244 = smul.u32 128, %s243
        $region44: #{net_forward.1} parent=39 // pred_fallthru
          _
      $region40: #{net_forward.1} parent=5 // pred_fallthru
        _
      %p245 = scmp.le.s32.totalorder 1, %s13
      %p246 = scmp.lt.s32.totalorder %s13, 3
      %p247 = pnand %p245, %p246
      %p248 = pneg %p247
      // Predicated region
      $region45: #{net_forward.1} parent=5 // pred_check
        _
      $region46: #{net_forward.1} parent=5 // pred_check_branch
        %250 = sbr.rel (%p247) target = $region48
      $region47: #{net_forward.1} parent=5 // pred_region
        %s251 = ssub.s32 %s13, 1
        %s252 = smul.u32 13, %s18
        %s253 = ssub.s32 25, %s252
        %p254 = scmp.lt.s32.totalorder %s253, 13
        %s255 = scalar_select %p254, %s253, 13
        %s256 = smul.u32 128, %s255
        %p257 = scmp.lt.s32.totalorder %s252, 24
        %s258 = scalar_select %p257, %s252, 24
        %s259 = smul.addr %s258, 8
        %s260 = scalar_lea.vmem %s0, %s259
        %p261 = pneg %p39
        %p262 = pneg %p36
        %p263 = pneg %p60
        %p264 = pneg %p57
        %p265 = pneg %p81
        %p266 = pneg %p78
        %p267 = pneg %p102
        %p268 = pneg %p99
        %p269 = pneg %p123
        %p270 = pneg %p120
        %p271 = pneg %p144
        %p272 = pneg %p141
        %p273 = pneg %p165
        %p274 = pneg %p162
        %p275 = pneg %p191
        %p276 = pneg %p188
        %s277 = sand.u32 %s178, 1
        %s278 = sand.u32 %s178, 1
        %s279 = smul.addr %s278, 104
        %s280 = scalar_lea.vmem [#allocation2], %s279
        %s281 = smul.u32 13, %s18
        %s282 = ssub.s32 25, %s281
        %p283 = scmp.lt.s32.totalorder %s282, 13
        %s284 = scalar_select %p283, %s282, 13
        %s285 = smul.u32 128, %s284
        %p286 = scmp.lt.s32.totalorder %s281, 24
        %s287 = scalar_select %p286, %s281, 24
        %s288 = smul.addr %s287, 8
        %s289 = scalar_lea.vmem %s0, %s288
        %s290 = smul.u32 13, %s18
        %s291 = ssub.s32 25, %s290
        %p292 = scmp.lt.s32.totalorder %s291, 13
        %s293 = scalar_select %p292, %s291, 13
        %s294 = smul.u32 128, %s293
        %s295 = smul.u32 13, %s18
        %s296 = ssub.s32 25, %s295
        %p297 = scmp.lt.s32.totalorder %s296, 13
        %s298 = scalar_select %p297, %s296, 13
        %s299 = smul.u32 128, %s298
        %v301 = vld [vmem:[%s289] sm:$0xff]
        %v302 = vld [vmem:[%s289 + $0x8] sm:$0xff]
        %v303 = vld [vmem:[%s289 + $0x10] sm:$0xff]
        %v304 = vld [vmem:[%s289 + $0x18] sm:$0xff]
        %v305 = vld [vmem:[%s289 + $0x20] sm:$0xff]
        %v306 = vld [vmem:[%s289 + $0x28] sm:$0xff]
        %v307 = vld [vmem:[%s289 + $0x30] sm:$0xff]
        %v308 = vld [vmem:[%s289 + $0x38] sm:$0xff]
        %v309 = vld [vmem:[%s289 + $0x40] sm:$0xff]
        %v310 = vld [vmem:[%s289 + $0x48] sm:$0xff]
        %v311 = vld [vmem:[%s289 + $0x50] sm:$0xff]
        %v312 = vld [vmem:[%s289 + $0x58] sm:$0xff]
        %v313 = vld [vmem:[%s289 + $0x60] sm:$0xff]
        %v314 = vpack.c.bf16 %v302, %v301
        %v315 = vpack.c.bf16 %v304, %v303
        %v316 = vpack.c.bf16 %v306, %v305
        %v317 = vpack.c.bf16 %v308, %v307
        %v318 = vpack.c.bf16 %v310, %v309
        %v319 = vpack.c.bf16 %v312, %v311
        %v320 = vpack.c.bf16 %v313, %v313
        %v321 = vld [vmem:[%s1] sm:$0xf]
        %v322 = vld [vmem:[%s1 + $0x4] sm:$0xf]
        %v323 = vld [vmem:[%s1 + $0x8] sm:$0xf]
        %v324 = vld [vmem:[%s1 + $0xc] sm:$0xf]
        %v325 = vld [vmem:[%s2] sm:$0x1]
        %v327 = vlaneseq
        %v328 = vshrl.u32 %v327, 7
        %v329 = vsub.s32 0, %v328
        %v330 = vrot.slane %v325, %v329
        %v336 = vunpack.c.l.b16 %v321
        %v337 = vunpack.c.l.b16 %v322
        %v338 = vunpack.c.l.b16 %v323
        %v339 = vunpack.c.l.b16 %v324
        %v340 = vpack.c.b16 %v337, %v336
        %v341 = vpack.c.b16 %v339, %v338
        %vm344 = vcmask 261120
        %v346 = vsel %vm344, %v314, 0
        %v349 = vsel %vm344, %v315, 0
        %v352 = vsel %vm344, %v316, 0
        %v355 = vsel %vm344, %v317, 0
        %v358 = vsel %vm344, %v318, 0
        %v361 = vsel %vm344, %v319, 0
        %v364 = vsel %vm344, %v320, 0
        %366 = vmatprep.subr.bf16.mxu0 0
        %367 = vmatpush1.bf16.msra.mxu0 %v340
        %368 = vmatprep.subr.bf16.mxu0 0
        %369 = vmatpush1.bf16.msra.mxu0 %v341
        %370 = vmatprep.subr.bf16.mxu0 0
        %371 = vmatpush1.bf16.msra.mxu0 0
        %372 = vmatprep.subr.bf16.mxu0 0
        %373 = vmatpush1.bf16.msra.mxu0 0
        %374 = vmatprep.subr.bf16.mxu0 0
        %375 = vmatpush1.bf16.msra.mxu0 0
        %376 = vmatprep.subr.bf16.mxu0 0
        %377 = vmatpush1.bf16.msra.mxu0 0
        %378 = vmatprep.subr.bf16.mxu0 0
        %379 = vmatpush1.bf16.msra.mxu0 0
        %380 = vmatprep.subr.bf16.mxu0 0
        %381 = vmatpush1.bf16.msra.mxu0 0
        %382 = vmatprep.subr.bf16.mxu0 0
        %383 = vmatpush1.bf16.msra.mxu0 0
        %384 = vmatprep.subr.bf16.mxu0 0
        %385 = vmatpush1.bf16.msra.mxu0 0
        %386 = vmatprep.subr.bf16.mxu0 0
        %387 = vmatpush1.bf16.msra.mxu0 0
        %388 = vmatprep.subr.bf16.mxu0 0
        %389 = vmatpush1.bf16.msra.mxu0 0
        %390 = vmatprep.subr.bf16.mxu0 0
        %391 = vmatpush1.bf16.msra.mxu0 0
        %392 = vmatprep.subr.bf16.mxu0 0
        %393 = vmatpush1.bf16.msra.mxu0 0
        %394 = vmatprep.subr.bf16.mxu0 0
        %395 = vmatpush1.bf16.msra.mxu0 0
        %396 = vmatprep.subr.bf16.mxu0 0
        %397 = vmatpush1.bf16.msra.mxu0 0
        %398 = vmatprep.mubr.bf16.mxu0 0
        %399 = vmatmul.mubr.bf16.gmra.mrb[0].mxu0 %v346
        %v400 = vpop.f32.mrb[0].mxu0
        %v401 = vadd.f32 %v330, %v400
        %v402 = vpop.f32.mrb[0].mxu0
        %v403 = vpop.f32.mrb[0].mxu0
        %v404 = vadd.f32 %v330, %v403
        %v405 = vpop.f32.mrb[0].mxu0
        %406 = vmatprep.mubr.bf16.mxu0 0
        %407 = vmatmul.mubr.bf16.gmra.mrb[0].mxu0 %v349
        %v408 = vpop.f32.mrb[0].mxu0
        %v409 = vadd.f32 %v330, %v408
        %v410 = vpop.f32.mrb[0].mxu0
        %v411 = vpop.f32.mrb[0].mxu0
        %v412 = vadd.f32 %v330, %v411
        %v413 = vpop.f32.mrb[0].mxu0
        %414 = vmatprep.mubr.bf16.mxu0 0
        %415 = vmatmul.mubr.bf16.gmra.mrb[0].mxu0 %v352
        %v416 = vpop.f32.mrb[0].mxu0
        %v417 = vadd.f32 %v330, %v416
        %v418 = vpop.f32.mrb[0].mxu0
        %v419 = vpop.f32.mrb[0].mxu0
        %v420 = vadd.f32 %v330, %v419
        %v421 = vpop.f32.mrb[0].mxu0
        %422 = vmatprep.mubr.bf16.mxu0 0
        %423 = vmatmul.mubr.bf16.gmra.mrb[0].mxu0 %v355
        %v424 = vpop.f32.mrb[0].mxu0
        %v425 = vadd.f32 %v330, %v424
        %v426 = vpop.f32.mrb[0].mxu0
        %v427 = vpop.f32.mrb[0].mxu0
        %v428 = vadd.f32 %v330, %v427
        %v429 = vpop.f32.mrb[0].mxu0
        %430 = vmatprep.mubr.bf16.mxu0 0
        %431 = vmatmul.mubr.bf16.gmra.mrb[0].mxu0 %v358
        %v432 = vpop.f32.mrb[0].mxu0
        %v433 = vadd.f32 %v330, %v432
        %v434 = vpop.f32.mrb[0].mxu0
        %v435 = vpop.f32.mrb[0].mxu0
        %v436 = vadd.f32 %v330, %v435
        %v437 = vpop.f32.mrb[0].mxu0
        %438 = vmatprep.mubr.bf16.mxu0 0
        %439 = vmatmul.mubr.bf16.gmra.mrb[0].mxu0 %v361
        %v440 = vpop.f32.mrb[0].mxu0
        %v441 = vadd.f32 %v330, %v440
        %v442 = vpop.f32.mrb[0].mxu0
        %v443 = vpop.f32.mrb[0].mxu0
        %v444 = vadd.f32 %v330, %v443
        %v445 = vpop.f32.mrb[0].mxu0
        %446 = vmatprep.mubr.bf16.mxu0 0
        %447 = vmatmul.mubr.bf16.gmra.mrb[0].mxu0 %v364
        %v448 = vpop.f32.mrb[0].mxu0
        %v449 = vadd.f32 %v330, %v448
        %v450 = vpop.f32.mrb[0].mxu0
        %v451 = vpop.f32.mrb[0].mxu0
        %v452 = vpop.f32.mrb[0].mxu0
        %453 = vdwg.mxu0
        %v454 = vmax.f32 %v401, 0.0
        %v455 = vmax.f32 %v404, 0.0
        %v456 = vmax.f32 %v409, 0.0
        %v457 = vmax.f32 %v412, 0.0
        %v458 = vmax.f32 %v417, 0.0
        %v459 = vmax.f32 %v420, 0.0
        %v460 = vmax.f32 %v425, 0.0
        %v461 = vmax.f32 %v428, 0.0
        %v462 = vmax.f32 %v433, 0.0
        %v463 = vmax.f32 %v436, 0.0
        %v464 = vmax.f32 %v441, 0.0
        %v465 = vmax.f32 %v444, 0.0
        %v466 = vmax.f32 %v449, 0.0
        %v467 = vpack.c.bf16 %v455, %v454
        %v468 = vpack.c.bf16 %v457, %v456
        %v469 = vpack.c.bf16 %v459, %v458
        %v470 = vpack.c.bf16 %v461, %v460
        %v471 = vpack.c.bf16 %v463, %v462
        %v472 = vpack.c.bf16 %v465, %v464
        %v473 = vpack.c.bf16 %v466, %v466
        %v474 = vld [vmem:[%s3] sm:$0xf]
        %v475 = vld [vmem:[%s3 + $0x4] sm:$0xf]
        %v476 = vld [vmem:[%s3 + $0x8] sm:$0xf]
        %v477 = vld [vmem:[%s3 + $0xc] sm:$0xf]
        %v478 = vld [vmem:[%s3 + $0x10] sm:$0xf]
        %v479 = vld [vmem:[%s3 + $0x14] sm:$0xf]
        %v480 = vld [vmem:[%s3 + $0x18] sm:$0xf]
        %v481 = vld [vmem:[%s3 + $0x1c] sm:$0xf]
        %v482 = vld [vmem:[%s3 + $0x20] sm:$0xf]
        %v483 = vld [vmem:[%s3 + $0x24] sm:$0xf]
        %v484 = vld [vmem:[%s3 + $0x28] sm:$0xf]
        %v485 = vld [vmem:[%s3 + $0x2c] sm:$0xf]
        %v486 = vld [vmem:[%s3 + $0x30] sm:$0xf]
        %v487 = vld [vmem:[%s3 + $0x34] sm:$0xf]
        %v488 = vld [vmem:[%s3 + $0x38] sm:$0xf]
        %v489 = vld [vmem:[%s3 + $0x3c] sm:$0xf]
        %v490 = vld [vmem:[%s4] sm:$0x1]
        %v492 = vlaneseq
        %v493 = vshrl.u32 %v492, 7
        %v494 = vsub.s32 0, %v493
        %v495 = vrot.slane %v490, %v494
        %v513 = vunpack.c.l.b16 %v474
        %v514 = vunpack.c.l.b16 %v475
        %v515 = vunpack.c.l.b16 %v476
        %v516 = vunpack.c.l.b16 %v477
        %v517 = vunpack.c.l.b16 %v478
        %v518 = vunpack.c.l.b16 %v479
        %v519 = vunpack.c.l.b16 %v480
        %v520 = vunpack.c.l.b16 %v481
        %v521 = vunpack.c.l.b16 %v482
        %v522 = vunpack.c.l.b16 %v483
        %v523 = vunpack.c.l.b16 %v484
        %v524 = vunpack.c.l.b16 %v485
        %v525 = vunpack.c.l.b16 %v486
        %v526 = vunpack.c.l.b16 %v487
        %v527 = vunpack.c.l.b16 %v488
        %v528 = vunpack.c.l.b16 %v489
        %v529 = vpack.c.b16 %v514, %v513
        %v530 = vpack.c.b16 %v516, %v515
        %v531 = vpack.c.b16 %v518, %v517
        %v532 = vpack.c.b16 %v520, %v519
        %v533 = vpack.c.b16 %v522, %v521
        %v534 = vpack.c.b16 %v524, %v523
        %v535 = vpack.c.b16 %v526, %v525
        %v536 = vpack.c.b16 %v528, %v527
        %545 = vmatprep.subr.bf16.mxu0 0
        %546 = vmatpush1.bf16.msra.mxu0 %v529
        %547 = vmatprep.subr.bf16.mxu0 0
        %548 = vmatpush1.bf16.msra.mxu0 %v530
        %549 = vmatprep.subr.bf16.mxu0 0
        %550 = vmatpush1.bf16.msra.mxu0 %v531
        %551 = vmatprep.subr.bf16.mxu0 0
        %552 = vmatpush1.bf16.msra.mxu0 %v532
        %553 = vmatprep.subr.bf16.mxu0 0
        %554 = vmatpush1.bf16.msra.mxu0 %v533
        %555 = vmatprep.subr.bf16.mxu0 0
        %556 = vmatpush1.bf16.msra.mxu0 %v534
        %557 = vmatprep.subr.bf16.mxu0 0
        %558 = vmatpush1.bf16.msra.mxu0 %v535
        %559 = vmatprep.subr.bf16.mxu0 0
        %560 = vmatpush1.bf16.msra.mxu0 %v536
        %561 = vmatprep.subr.bf16.mxu0 0
        %562 = vmatpush1.bf16.msra.mxu0 0
        %563 = vmatprep.subr.bf16.mxu0 0
        %564 = vmatpush1.bf16.msra.mxu0 0
        %565 = vmatprep.subr.bf16.mxu0 0
        %566 = vmatpush1.bf16.msra.mxu0 0
        %567 = vmatprep.subr.bf16.mxu0 0
        %568 = vmatpush1.bf16.msra.mxu0 0
        %569 = vmatprep.subr.bf16.mxu0 0
        %570 = vmatpush1.bf16.msra.mxu0 0
        %571 = vmatprep.subr.bf16.mxu0 0
        %572 = vmatpush1.bf16.msra.mxu0 0
        %573 = vmatprep.subr.bf16.mxu0 0
        %574 = vmatpush1.bf16.msra.mxu0 0
        %575 = vmatprep.subr.bf16.mxu0 0
        %576 = vmatpush1.bf16.msra.mxu0 0
        %577 = vmatprep.mubr.bf16.mxu0 0
        %578 = vmatmul.mubr.bf16.gmra.mrb[0].mxu0 %v467
        %v579 = vpop.f32.mrb[0].mxu0
        %v580 = vadd.f32 %v495, %v579
        %v581 = vpop.f32.mrb[0].mxu0
        %v582 = vpop.f32.mrb[0].mxu0
        %v583 = vadd.f32 %v495, %v582
        %v584 = vpop.f32.mrb[0].mxu0
        %585 = vmatprep.mubr.bf16.mxu0 0
        %586 = vmatmul.mubr.bf16.gmra.mrb[0].mxu0 %v468
        %v587 = vpop.f32.mrb[0].mxu0
        %v588 = vadd.f32 %v495, %v587
        %v589 = vpop.f32.mrb[0].mxu0
        %v590 = vpop.f32.mrb[0].mxu0
        %v591 = vadd.f32 %v495, %v590
        %v592 = vpop.f32.mrb[0].mxu0
        %593 = vmatprep.mubr.bf16.mxu0 0
        %594 = vmatmul.mubr.bf16.gmra.mrb[0].mxu0 %v469
        %v595 = vpop.f32.mrb[0].mxu0
        %v596 = vadd.f32 %v495, %v595
        %v597 = vpop.f32.mrb[0].mxu0
        %v598 = vpop.f32.mrb[0].mxu0
        %v599 = vadd.f32 %v495, %v598
        %v600 = vpop.f32.mrb[0].mxu0
        %601 = vmatprep.mubr.bf16.mxu0 0
        %602 = vmatmul.mubr.bf16.gmra.mrb[0].mxu0 %v470
        %v603 = vpop.f32.mrb[0].mxu0
        %v604 = vadd.f32 %v495, %v603
        %v605 = vpop.f32.mrb[0].mxu0
        %v606 = vpop.f32.mrb[0].mxu0
        %v607 = vadd.f32 %v495, %v606
        %v608 = vpop.f32.mrb[0].mxu0
        %609 = vmatprep.mubr.bf16.mxu0 0
        %610 = vmatmul.mubr.bf16.gmra.mrb[0].mxu0 %v471
        %v611 = vpop.f32.mrb[0].mxu0
        %v612 = vadd.f32 %v495, %v611
        %v613 = vpop.f32.mrb[0].mxu0
        %v614 = vpop.f32.mrb[0].mxu0
        %v615 = vadd.f32 %v495, %v614
        %v616 = vpop.f32.mrb[0].mxu0
        %617 = vmatprep.mubr.bf16.mxu0 0
        %618 = vmatmul.mubr.bf16.gmra.mrb[0].mxu0 %v472
        %v619 = vpop.f32.mrb[0].mxu0
        %v620 = vadd.f32 %v495, %v619
        %v621 = vpop.f32.mrb[0].mxu0
        %v622 = vpop.f32.mrb[0].mxu0
        %v623 = vadd.f32 %v495, %v622
        %v624 = vpop.f32.mrb[0].mxu0
        %625 = vmatprep.mubr.bf16.mxu0 0
        %626 = vmatmul.mubr.bf16.gmra.mrb[0].mxu0 %v473
        %v627 = vpop.f32.mrb[0].mxu0
        %v628 = vadd.f32 %v495, %v627
        %v629 = vpop.f32.mrb[0].mxu0
        %v630 = vpop.f32.mrb[0].mxu0
        %v631 = vpop.f32.mrb[0].mxu0
        %632 = vdwg.mxu0
        %v633 = vmax.f32 %v580, 0.0
        %v634 = vmax.f32 %v583, 0.0
        %v635 = vmax.f32 %v588, 0.0
        %v636 = vmax.f32 %v591, 0.0
        %v637 = vmax.f32 %v596, 0.0
        %v638 = vmax.f32 %v599, 0.0
        %v639 = vmax.f32 %v604, 0.0
        %v640 = vmax.f32 %v607, 0.0
        %v641 = vmax.f32 %v612, 0.0
        %v642 = vmax.f32 %v615, 0.0
        %v643 = vmax.f32 %v620, 0.0
        %v644 = vmax.f32 %v623, 0.0
        %v645 = vmax.f32 %v628, 0.0
        %v646 = vpack.c.bf16 %v634, %v633
        %v647 = vpack.c.bf16 %v636, %v635
        %v648 = vpack.c.bf16 %v638, %v637
        %v649 = vpack.c.bf16 %v640, %v639
        %v650 = vpack.c.bf16 %v642, %v641
        %v651 = vpack.c.bf16 %v644, %v643
        %v652 = vpack.c.bf16 %v645, %v645
        %v653 = vld [vmem:[%s5] sm:$0xf]
        %v654 = vld [vmem:[%s5 + $0x4] sm:$0xf]
        %v655 = vld [vmem:[%s5 + $0x8] sm:$0xf]
        %v656 = vld [vmem:[%s5 + $0xc] sm:$0xf]
        %v657 = vld [vmem:[%s5 + $0x10] sm:$0xf]
        %v658 = vld [vmem:[%s5 + $0x14] sm:$0xf]
        %v659 = vld [vmem:[%s5 + $0x18] sm:$0xf]
        %v660 = vld [vmem:[%s5 + $0x1c] sm:$0xf]
        %v661 = vld [vmem:[%s5 + $0x20] sm:$0xf]
        %v662 = vld [vmem:[%s5 + $0x24] sm:$0xf]
        %v663 = vld [vmem:[%s5 + $0x28] sm:$0xf]
        %v664 = vld [vmem:[%s5 + $0x2c] sm:$0xf]
        %v665 = vld [vmem:[%s5 + $0x30] sm:$0xf]
        %v666 = vld [vmem:[%s5 + $0x34] sm:$0xf]
        %v667 = vld [vmem:[%s5 + $0x38] sm:$0xf]
        %v668 = vld [vmem:[%s5 + $0x3c] sm:$0xf]
        %v669 = vld [vmem:[%s6] sm:$0x1]
        %v671 = vlaneseq
        %v672 = vshrl.u32 %v671, 7
        %v673 = vsub.s32 0, %v672
        %v674 = vrot.slane %v669, %v673
        %v692 = vunpack.c.l.b16 %v653
        %v693 = vunpack.c.l.b16 %v654
        %v694 = vunpack.c.l.b16 %v655
        %v695 = vunpack.c.l.b16 %v656
        %v696 = vunpack.c.l.b16 %v657
        %v697 = vunpack.c.l.b16 %v658
        %v698 = vunpack.c.l.b16 %v659
        %v699 = vunpack.c.l.b16 %v660
        %v700 = vunpack.c.l.b16 %v661
        %v701 = vunpack.c.l.b16 %v662
        %v702 = vunpack.c.l.b16 %v663
        %v703 = vunpack.c.l.b16 %v664
        %v704 = vunpack.c.l.b16 %v665
        %v705 = vunpack.c.l.b16 %v666
        %v706 = vunpack.c.l.b16 %v667
        %v707 = vunpack.c.l.b16 %v668
        %v708 = vpack.c.b16 %v693, %v692
        %v709 = vpack.c.b16 %v695, %v694
        %v710 = vpack.c.b16 %v697, %v696
        %v711 = vpack.c.b16 %v699, %v698
        %v712 = vpack.c.b16 %v701, %v700
        %v713 = vpack.c.b16 %v703, %v702
        %v714 = vpack.c.b16 %v705, %v704
        %v715 = vpack.c.b16 %v707, %v706
        %724 = vmatprep.subr.bf16.mxu0 0
        %725 = vmatpush1.bf16.msra.mxu0 %v708
        %726 = vmatprep.subr.bf16.mxu0 0
        %727 = vmatpush1.bf16.msra.mxu0 %v709
        %728 = vmatprep.subr.bf16.mxu0 0
        %729 = vmatpush1.bf16.msra.mxu0 %v710
        %730 = vmatprep.subr.bf16.mxu0 0
        %731 = vmatpush1.bf16.msra.mxu0 %v711
        %732 = vmatprep.subr.bf16.mxu0 0
        %733 = vmatpush1.bf16.msra.mxu0 %v712
        %734 = vmatprep.subr.bf16.mxu0 0
        %735 = vmatpush1.bf16.msra.mxu0 %v713
        %736 = vmatprep.subr.bf16.mxu0 0
        %737 = vmatpush1.bf16.msra.mxu0 %v714
        %738 = vmatprep.subr.bf16.mxu0 0
        %739 = vmatpush1.bf16.msra.mxu0 %v715
        %740 = vmatprep.subr.bf16.mxu0 0
        %741 = vmatpush1.bf16.msra.mxu0 0
        %742 = vmatprep.subr.bf16.mxu0 0
        %743 = vmatpush1.bf16.msra.mxu0 0
        %744 = vmatprep.subr.bf16.mxu0 0
        %745 = vmatpush1.bf16.msra.mxu0 0
        %746 = vmatprep.subr.bf16.mxu0 0
        %747 = vmatpush1.bf16.msra.mxu0 0
        %748 = vmatprep.subr.bf16.mxu0 0
        %749 = vmatpush1.bf16.msra.mxu0 0
        %750 = vmatprep.subr.bf16.mxu0 0
        %751 = vmatpush1.bf16.msra.mxu0 0
        %752 = vmatprep.subr.bf16.mxu0 0
        %753 = vmatpush1.bf16.msra.mxu0 0
        %754 = vmatprep.subr.bf16.mxu0 0
        %755 = vmatpush1.bf16.msra.mxu0 0
        %756 = vmatprep.mubr.bf16.mxu0 0
        %757 = vmatmul.mubr.bf16.gmra.mrb[0].mxu0 %v646
        %v758 = vpop.f32.mrb[0].mxu0
        %v759 = vadd.f32 %v674, %v758
        %v760 = vpop.f32.mrb[0].mxu0
        %v761 = vpop.f32.mrb[0].mxu0
        %v762 = vadd.f32 %v674, %v761
        %v763 = vpop.f32.mrb[0].mxu0
        %764 = vmatprep.mubr.bf16.mxu0 0
        %765 = vmatmul.mubr.bf16.gmra.mrb[0].mxu0 %v647
        %v766 = vpop.f32.mrb[0].mxu0
        %v767 = vadd.f32 %v674, %v766
        %v768 = vpop.f32.mrb[0].mxu0
        %v769 = vpop.f32.mrb[0].mxu0
        %v770 = vadd.f32 %v674, %v769
        %v771 = vpop.f32.mrb[0].mxu0
        %772 = vmatprep.mubr.bf16.mxu0 0
        %773 = vmatmul.mubr.bf16.gmra.mrb[0].mxu0 %v648
        %v774 = vpop.f32.mrb[0].mxu0
        %v775 = vadd.f32 %v674, %v774
        %v776 = vpop.f32.mrb[0].mxu0
        %v777 = vpop.f32.mrb[0].mxu0
        %v778 = vadd.f32 %v674, %v777
        %v779 = vpop.f32.mrb[0].mxu0
        %780 = vmatprep.mubr.bf16.mxu0 0
        %781 = vmatmul.mubr.bf16.gmra.mrb[0].mxu0 %v649
        %v782 = vpop.f32.mrb[0].mxu0
        %v783 = vadd.f32 %v674, %v782
        %v784 = vpop.f32.mrb[0].mxu0
        %v785 = vpop.f32.mrb[0].mxu0
        %v786 = vadd.f32 %v674, %v785
        %v787 = vpop.f32.mrb[0].mxu0
        %788 = vmatprep.mubr.bf16.mxu0 0
        %789 = vmatmul.mubr.bf16.gmra.mrb[0].mxu0 %v650
        %v790 = vpop.f32.mrb[0].mxu0
        %v791 = vadd.f32 %v674, %v790
        %v792 = vpop.f32.mrb[0].mxu0
        %v793 = vpop.f32.mrb[0].mxu0
        %v794 = vadd.f32 %v674, %v793
        %v795 = vpop.f32.mrb[0].mxu0
        %796 = vmatprep.mubr.bf16.mxu0 0
        %797 = vmatmul.mubr.bf16.gmra.mrb[0].mxu0 %v651
        %v798 = vpop.f32.mrb[0].mxu0
        %v799 = vadd.f32 %v674, %v798
        %v800 = vpop.f32.mrb[0].mxu0
        %v801 = vpop.f32.mrb[0].mxu0
        %v802 = vadd.f32 %v674, %v801
        %v803 = vpop.f32.mrb[0].mxu0
        %804 = vmatprep.mubr.bf16.mxu0 0
        %805 = vmatmul.mubr.bf16.gmra.mrb[0].mxu0 %v652
        %v806 = vpop.f32.mrb[0].mxu0
        %v807 = vadd.f32 %v674, %v806
        %v808 = vpop.f32.mrb[0].mxu0
        %v809 = vpop.f32.mrb[0].mxu0
        %v810 = vpop.f32.mrb[0].mxu0
        %811 = vdwg.mxu0
        %v812 = vmax.f32 %v759, 0.0
        %v813 = vmax.f32 %v762, 0.0
        %v814 = vmax.f32 %v767, 0.0
        %v815 = vmax.f32 %v770, 0.0
        %v816 = vmax.f32 %v775, 0.0
        %v817 = vmax.f32 %v778, 0.0
        %v818 = vmax.f32 %v783, 0.0
        %v819 = vmax.f32 %v786, 0.0
        %v820 = vmax.f32 %v791, 0.0
        %v821 = vmax.f32 %v794, 0.0
        %v822 = vmax.f32 %v799, 0.0
        %v823 = vmax.f32 %v802, 0.0
        %v824 = vmax.f32 %v807, 0.0
        %vm825 = vcmask 130048
        %826 = vst.msk [vmem:[%s280] sm:$0xff] %vm825, %v812
        %827 = vst.msk [vmem:[%s280 + $0x8] sm:$0xff] %vm825, %v813
        %828 = vst.msk [vmem:[%s280 + $0x10] sm:$0xff] %vm825, %v814
        %829 = vst.msk [vmem:[%s280 + $0x18] sm:$0xff] %vm825, %v815
        %830 = vst.msk [vmem:[%s280 + $0x20] sm:$0xff] %vm825, %v816
        %831 = vst.msk [vmem:[%s280 + $0x28] sm:$0xff] %vm825, %v817
        %832 = vst.msk [vmem:[%s280 + $0x30] sm:$0xff] %vm825, %v818
        %833 = vst.msk [vmem:[%s280 + $0x38] sm:$0xff] %vm825, %v819
        %834 = vst.msk [vmem:[%s280 + $0x40] sm:$0xff] %vm825, %v820
        %835 = vst.msk [vmem:[%s280 + $0x48] sm:$0xff] %vm825, %v821
        %836 = vst.msk [vmem:[%s280 + $0x50] sm:$0xff] %vm825, %v822
        %837 = vst.msk [vmem:[%s280 + $0x58] sm:$0xff] %vm825, %v823
        %838 = vst.msk [vmem:[%s280 + $0x60] sm:$0xff] %vm825, %v824
        %s839 = sand.u32 %s178, 1
        %s840 = sand.u32 %s178, 1
        %s841 = smul.addr %s840, 104
        %s842 = scalar_lea.vmem [#allocation2], %s841
        // Predicated region
        $region49: #{net_forward.1} parent=47 // pred_check
          %p843 = pneg %p188
        $region50: #{net_forward.1} parent=47 // pred_check_branch
          %845 = sbr.rel (%p843) target = $region52
        $region51: #{net_forward.1} parent=47 // pred_region
          %s846 = smul.u32 13, %s18
          %s847 = ssub.s32 25, %s846
          %p848 = scmp.lt.s32.totalorder %s847, 13
          %s849 = scalar_select %p848, %s847, 13
          %s850 = smul.u32 128, %s849
          %p851 = scmp.ne.s32.totalorder 0, %s850
          %s852 = smul.addr %s846, 8
          %s853 = scalar_lea.vmem %s7, %s852
          // Predicated region
          $region53: #{net_forward.1} parent=51 // pred_check
            %p854 = pneg %p851
          $region54: #{net_forward.1} parent=51 // pred_check_branch
            %856 = sbr.rel (%p854) target = $region56
          $region55: #{net_forward.1} parent=51 // pred_region
            // Predicated region
            $region57: #{net_forward.1} parent=55 // pred_check
              _
            $region58: #{net_forward.1} parent=55 // pred_check_branch
              %858 = sbr.rel (0) target = $region60
            $region59: #{net_forward.1} parent=55 // pred_region
              // Predicated region
              $region79: #{net_forward.1} parent=59 // pred_check
                _
              $region80: #{net_forward.1} parent=59 // pred_check_branch
                %932 = sbr.rel (0) target = $region82
              $region81: #{net_forward.1} parent=59 // pred_region
                %s933 = sdiv.u32.pop %s849, 13
                %s934 = srem.u32.pop %s849, 13
                // While loop
                $region83: #{net_forward.1} parent=81 // loop_pre_header
                  _
                $region84: #{net_forward.1} parent=81 // loop_header
                  %s936 = sphi 0, %s938
                  %p937 = scmp.ge.s32.totalorder %s936, %s933
                  %s941 = sphi 0, %s972
                  %s942 = sphi %s842, %s975
                  %s943 = sphi %s853, %s976
                $region85: #{net_forward.1} parent=81 // loop_header_branch
                  %940 = sbr.rel (%p937) target = $region89
                $region86: #{net_forward.1} parent=81 // loop_body
                  %v944 = vld [vmem:[%s942] sm:$0xff]
                  %945 = vst [vmem:[%s943] sm:$0xff] %v944
                  %v946 = vld [vmem:[%s942 + $0x8] sm:$0xff]
                  %947 = vst [vmem:[%s943 + $0x8] sm:$0xff] %v946
                  %v948 = vld [vmem:[%s942 + $0x10] sm:$0xff]
                  %949 = vst [vmem:[%s943 + $0x10] sm:$0xff] %v948
                  %v950 = vld [vmem:[%s942 + $0x18] sm:$0xff]
                  %951 = vst [vmem:[%s943 + $0x18] sm:$0xff] %v950
                  %v952 = vld [vmem:[%s942 + $0x20] sm:$0xff]
                  %953 = vst [vmem:[%s943 + $0x20] sm:$0xff] %v952
                  %v954 = vld [vmem:[%s942 + $0x28] sm:$0xff]
                  %955 = vst [vmem:[%s943 + $0x28] sm:$0xff] %v954
                  %v956 = vld [vmem:[%s942 + $0x30] sm:$0xff]
                  %957 = vst [vmem:[%s943 + $0x30] sm:$0xff] %v956
                  %v958 = vld [vmem:[%s942 + $0x38] sm:$0xff]
                  %959 = vst [vmem:[%s943 + $0x38] sm:$0xff] %v958
                  %v960 = vld [vmem:[%s942 + $0x40] sm:$0xff]
                  %961 = vst [vmem:[%s943 + $0x40] sm:$0xff] %v960
                  %v962 = vld [vmem:[%s942 + $0x48] sm:$0xff]
                  %963 = vst [vmem:[%s943 + $0x48] sm:$0xff] %v962
                  %v964 = vld [vmem:[%s942 + $0x50] sm:$0xff]
                  %965 = vst [vmem:[%s943 + $0x50] sm:$0xff] %v964
                  %v966 = vld [vmem:[%s942 + $0x58] sm:$0xff]
                  %967 = vst [vmem:[%s943 + $0x58] sm:$0xff] %v966
                  %v968 = vld [vmem:[%s942 + $0x60] sm:$0xff]
                  %969 = vst [vmem:[%s943 + $0x60] sm:$0xff] %v968
                  %s970 = sadd.s32 1, %s941
                  %p971 = scmp.ge.s32.totalorder %s970, %s933
                  %s972 = scalar_select %p971, 0, %s970
                  %s973 = smul.u32 %s972, 104
                  %s974 = smul.u32 %s972, 104
                  %s975 = scalar_lea.vmem %s842, %s973 [#allocation2]
                  %s976 = scalar_lea.vmem %s853, %s974
                $region87: #{net_forward.1} parent=81 // loop_footer
                  %s938 = sadd.s32 %s936, 1
                $region88: #{net_forward.1} parent=81 // loop_footer_branch
                  %935 = sbr.rel target = $region84
                $region89: #{net_forward.1} parent=81 // loop_exit
                  _
                %s977 = sdiv.u32.pop %s849, 13
                %s978 = srem.u32.pop %s849, 13
                %s979 = smul.u32 %s977, 13
                %s980 = smul.u32 8, %s979
                %s981 = scalar_lea.vmem %s842, %s980 [#allocation2]
                %s982 = smul.u32 8, %s979
                %s983 = scalar_lea.vmem %s853, %s982
                // While loop
                $region90: #{net_forward.1} parent=81 // loop_pre_header
                  _
                $region91: #{net_forward.1} parent=81 // loop_header
                  %s985 = sphi 0, %s987
                  %p986 = scmp.ge.s32.totalorder %s985, %s978
                  %s990 = sphi 0, %s997
                  %s991 = sphi %s981, %s1000
                  %s992 = sphi %s983, %s1001
                $region92: #{net_forward.1} parent=81 // loop_header_branch
                  %989 = sbr.rel (%p986) target = $region96
                $region93: #{net_forward.1} parent=81 // loop_body
                  %v993 = vld [vmem:[%s991] sm:$0xff]
                  %994 = vst [vmem:[%s992] sm:$0xff] %v993
                  %s995 = sadd.s32 1, %s990
                  %p996 = scmp.ge.s32.totalorder %s995, %s978
                  %s997 = scalar_select %p996, 0, %s995
                  %s998 = smul.u32 %s997, 8
                  %s999 = smul.u32 %s997, 8
                  %s1000 = scalar_lea.vmem %s981, %s998 [#allocation2]
                  %s1001 = scalar_lea.vmem %s983, %s999
                $region94: #{net_forward.1} parent=81 // loop_footer
                  %s987 = sadd.s32 %s985, 1
                $region95: #{net_forward.1} parent=81 // loop_footer_branch
                  %984 = sbr.rel target = $region91
                $region96: #{net_forward.1} parent=81 // loop_exit
                  _
              $region82: #{net_forward.1} parent=59 // pred_fallthru
                _
              // Predicated region
              $region97: #{net_forward.1} parent=59 // pred_check
                _
              $region98: #{net_forward.1} parent=59 // pred_check_branch
                %1003 = sbr.rel target = $region100
              $region99: #{net_forward.1} parent=59 // pred_region
                _
              $region100: #{net_forward.1} parent=59 // pred_fallthru
                _
            $region60: #{net_forward.1} parent=55 // pred_fallthru
              _
            // Predicated region
            $region61: #{net_forward.1} parent=55 // pred_check
              _
            $region62: #{net_forward.1} parent=55 // pred_check_branch
              %860 = sbr.rel target = $region64
            $region63: #{net_forward.1} parent=55 // pred_region
              %s862 = sdiv.u32.pop %s849, 13
              %s863 = srem.u32.pop %s849, 13
              // While loop
              $region65: #{net_forward.1} parent=63 // loop_pre_header
                _
              $region66: #{net_forward.1} parent=63 // loop_header
                %s865 = sphi 0, %s867
                %p866 = scmp.ge.s32.totalorder %s865, %s862
                %s870 = sphi 0, %s901
                %s871 = sphi %s842, %s904
                %s872 = sphi %s853, %s905
              $region67: #{net_forward.1} parent=63 // loop_header_branch
                %869 = sbr.rel (%p866) target = $region71
              $region68: #{net_forward.1} parent=63 // loop_body
                %v873 = vld [vmem:[%s871] sm:$0xff]
                %874 = vst [vmem:[%s872] sm:$0xff] %v873
                %v875 = vld [vmem:[%s871 + $0x8] sm:$0xff]
                %876 = vst [vmem:[%s872 + $0x8] sm:$0xff] %v875
                %v877 = vld [vmem:[%s871 + $0x10] sm:$0xff]
                %878 = vst [vmem:[%s872 + $0x10] sm:$0xff] %v877
                %v879 = vld [vmem:[%s871 + $0x18] sm:$0xff]
                %880 = vst [vmem:[%s872 + $0x18] sm:$0xff] %v879
                %v881 = vld [vmem:[%s871 + $0x20] sm:$0xff]
                %882 = vst [vmem:[%s872 + $0x20] sm:$0xff] %v881
                %v883 = vld [vmem:[%s871 + $0x28] sm:$0xff]
                %884 = vst [vmem:[%s872 + $0x28] sm:$0xff] %v883
                %v885 = vld [vmem:[%s871 + $0x30] sm:$0xff]
                %886 = vst [vmem:[%s872 + $0x30] sm:$0xff] %v885
                %v887 = vld [vmem:[%s871 + $0x38] sm:$0xff]
                %888 = vst [vmem:[%s872 + $0x38] sm:$0xff] %v887
                %v889 = vld [vmem:[%s871 + $0x40] sm:$0xff]
                %890 = vst [vmem:[%s872 + $0x40] sm:$0xff] %v889
                %v891 = vld [vmem:[%s871 + $0x48] sm:$0xff]
                %892 = vst [vmem:[%s872 + $0x48] sm:$0xff] %v891
                %v893 = vld [vmem:[%s871 + $0x50] sm:$0xff]
                %894 = vst [vmem:[%s872 + $0x50] sm:$0xff] %v893
                %v895 = vld [vmem:[%s871 + $0x58] sm:$0xff]
                %896 = vst [vmem:[%s872 + $0x58] sm:$0xff] %v895
                %v897 = vld [vmem:[%s871 + $0x60] sm:$0xff]
                %898 = vst [vmem:[%s872 + $0x60] sm:$0xff] %v897
                %s899 = sadd.s32 1, %s870
                %p900 = scmp.ge.s32.totalorder %s899, %s862
                %s901 = scalar_select %p900, 0, %s899
                %s902 = smul.u32 %s901, 104
                %s903 = smul.u32 %s901, 104
                %s904 = scalar_lea.vmem %s842, %s902 [#allocation2]
                %s905 = scalar_lea.vmem %s853, %s903
              $region69: #{net_forward.1} parent=63 // loop_footer
                %s867 = sadd.s32 %s865, 1
              $region70: #{net_forward.1} parent=63 // loop_footer_branch
                %864 = sbr.rel target = $region66
              $region71: #{net_forward.1} parent=63 // loop_exit
                _
              %s906 = sdiv.u32.pop %s849, 13
              %s907 = srem.u32.pop %s849, 13
              %s908 = smul.u32 %s906, 13
              %s909 = smul.u32 8, %s908
              %s910 = scalar_lea.vmem %s842, %s909 [#allocation2]
              %s911 = smul.u32 8, %s908
              %s912 = scalar_lea.vmem %s853, %s911
              // While loop
              $region72: #{net_forward.1} parent=63 // loop_pre_header
                _
              $region73: #{net_forward.1} parent=63 // loop_header
                %s914 = sphi 0, %s916
                %p915 = scmp.ge.s32.totalorder %s914, %s907
                %s919 = sphi 0, %s926
                %s920 = sphi %s910, %s929
                %s921 = sphi %s912, %s930
              $region74: #{net_forward.1} parent=63 // loop_header_branch
                %918 = sbr.rel (%p915) target = $region78
              $region75: #{net_forward.1} parent=63 // loop_body
                %v922 = vld [vmem:[%s920] sm:$0xff]
                %923 = vst [vmem:[%s921] sm:$0xff] %v922
                %s924 = sadd.s32 1, %s919
                %p925 = scmp.ge.s32.totalorder %s924, %s907
                %s926 = scalar_select %p925, 0, %s924
                %s927 = smul.u32 %s926, 8
                %s928 = smul.u32 %s926, 8
                %s929 = scalar_lea.vmem %s910, %s927 [#allocation2]
                %s930 = scalar_lea.vmem %s912, %s928
              $region76: #{net_forward.1} parent=63 // loop_footer
                %s916 = sadd.s32 %s914, 1
              $region77: #{net_forward.1} parent=63 // loop_footer_branch
                %913 = sbr.rel target = $region73
              $region78: #{net_forward.1} parent=63 // loop_exit
                _
            $region64: #{net_forward.1} parent=55 // pred_fallthru
              _
          $region56: #{net_forward.1} parent=51 // pred_fallthru
            _
          %1004 = vnop
        $region52: #{net_forward.1} parent=47 // pred_fallthru
          _
      $region48: #{net_forward.1} parent=5 // pred_fallthru
        _
      %p1005 = scmp.le.s32.totalorder 2, %s13
      // Predicated region
      $region101: #{net_forward.1} parent=5 // pred_check
        %p1006 = pneg %p1005
      $region102: #{net_forward.1} parent=5 // pred_check_branch
        %1008 = sbr.rel (%p1006) target = $region104
      $region103: #{net_forward.1} parent=5 // pred_region
        %s1009 = ssub.s32 %s13, 2
        // Predicated region
        $region105: #{net_forward.1} parent=103 // pred_check
          %p1010 = pneg %p194
        $region106: #{net_forward.1} parent=103 // pred_check_branch
          %1012 = sbr.rel (%p1010) target = $region108
        $region107: #{net_forward.1} parent=103 // pred_region
          %s1013 = sand.u32 %s179, 1
          %s1014 = sand.u32 %s179, 1
          %s1015 = smul.addr %s1014, 104
          %s1016 = scalar_lea.vmem [#allocation2], %s1015
        $region108: #{net_forward.1} parent=103 // pred_fallthru
          _
      $region104: #{net_forward.1} parent=5 // pred_fallthru
        _
    $region6: #{net_forward.1} parent=1 // loop_footer
      %s17 = sadd.s32 1, %s13
    $region7: #{net_forward.1} parent=1 // loop_footer_branch
      %12 = sbr.rel target = $region3
    $region8: #{net_forward.1} parent=1 // loop_exit
      _

</llo_original>
